<compile_context>
chip_gen: v6e
topology: v6e:2x2x1
jax: 0.10.0
libtpu: 0.0.40
codegen_flags: <defaults>
</compile_context>

<pallas_src>
import jax
import jax.numpy as jnp
from jax.experimental import pallas as pl
from jax.experimental.pallas import tpu as pltpu


def attention_kernel(out_ref, ctx_ref, w_in_ref, b_in_ref,
                     w_out_ctx_ref, w_out_dec_ref, b_out_ref,
                     y_ref, atten_ref):
    output = out_ref[...]            # (Bblk, Q, D)
    context = ctx_ref[...]           # (Bblk, K, 2E)
    B, Q, D = output.shape
    K = context.shape[1]
    twoE = context.shape[2]

    # liner_in for the whole block in ONE MXU call (B folded into rows).
    # The reshape is free when K is a multiple of the 8-sublane tile (it is in
    # the demo); otherwise it still works, just with a relayout copy.
    ctx_in = (jnp.dot(context.reshape(B * K, twoE), w_in_ref[...],
                      preferred_element_type=jnp.float32)
              + b_in_ref[...]).reshape(B, K, D)

    # scores = output @ ctx_in^T (batched); the K-transpose is folded into the
    # dot_general contraction instead of materializing an XLU transpose.
    scores = jnp.einsum('bqd,bkd->bqk', output, ctx_in,
                        preferred_element_type=jnp.float32)

    # masked_fill in the reference is a discarded non-in-place op -> no mask.
    # Softmax over enc_seq; exact reciprocal keeps the 1e-5 tolerance.
    m = jnp.max(scores, axis=-1, keepdims=True)
    e = jnp.exp(scores - m)
    s = jnp.sum(e, axis=-1, keepdims=True)
    probs = e * pl.reciprocal(s, approx=False)

    # Emit atten as a 2-D slab; 3-D view happens (metadata-only) in the wrapper.
    atten_ref[...] = probs.reshape(B * Q, K)

    # weighted context: (B, Q, K) @ (B, K, 2E) -> (B, Q, 2E), batched.
    ctx2 = jnp.einsum('bqk,bke->bqe', probs, context,
                      preferred_element_type=jnp.float32)

    # liner_out on concat([ctx2, output], -1) as a split matmul with B folded
    # into rows -> two (B*Q, .) @ (., D) MXU calls and one lane-dense store.
    pre = (jnp.dot(ctx2.reshape(B * Q, twoE), w_out_ctx_ref[...],
                   preferred_element_type=jnp.float32)
           + jnp.dot(output.reshape(B * Q, D), w_out_dec_ref[...],
                     preferred_element_type=jnp.float32)
           + b_out_ref[...])
    y_ref[...] = jnp.tanh(pre)


def prepare_attention_params(w_in, b_in, w_out, b_out):
    """One-time preprocessing of torch-layout Linear weights.

    w_in : (D, 2E)       (torch (out, in) layout)
    w_out: (D, 2E + D)
    Returns pre-transposed / split f32 params; call once at module init, NOT
    per forward step.
    """
    D, twoE = w_in.shape
    w_in_t = jnp.asarray(w_in, jnp.float32).T            # (2E, D)
    w_out_t = jnp.asarray(w_out, jnp.float32).T          # (2E+D, D)
    return dict(
        w_in_t=w_in_t,
        w_out_ctx=w_out_t[:twoE],                        # (2E, D)
        w_out_dec=w_out_t[twoE:],                        # (D, D)
        b_in=jnp.asarray(b_in, jnp.float32).reshape(1, D),
        b_out=jnp.asarray(b_out, jnp.float32).reshape(1, D),
    )


def attention_forward(output, context, mask, params, *, batch_grid=None):
    """PyTorch-equivalent forward using preprocessed `params`.

    Returns (y, atten) with y: (B, dec_seq, D), atten: (B, dec_seq, enc_seq).
    """
    del mask  # faithfully ignored (see NOTE at top of file)
    B, Q, D = output.shape
    _, K, twoE = context.shape
    output = output.astype(jnp.float32)
    context = context.astype(jnp.float32)

    # Advisory cost hint so XLA can schedule neighbors around this tiny call.
    flops = 2 * B * (K * twoE * D + Q * D * K + Q * K * twoE + Q * (twoE + D) * D)
    bytes_accessed = 4 * (B * Q * D + B * K * twoE            # activations in
                          + twoE * D + (twoE + D) * D + 2 * D  # weights/biases
                          + B * Q * D + B * Q * K)             # outputs
    cost = pl.CostEstimate(flops=flops,
                           transcendentals=B * Q * (K + D + 1),
                           bytes_accessed=bytes_accessed)

    if batch_grid is None:
        # Shard over batch (useful on v7x's 2 TCs, and to bound VMEM) only once
        # the per-batch working set is big enough to amortize per-step overhead.
        per_batch_bytes = 4 * (Q * D + K * twoE + K * D + 2 * Q * K + Q * twoE + Q * D)
        batch_grid = (B > 1) and per_batch_bytes >= (1 << 20)

    args = (output, context, params["w_in_t"], params["b_in"],
            params["w_out_ctx"], params["w_out_dec"], params["b_out"])
    out_shape = (jax.ShapeDtypeStruct((B * Q, D), jnp.float32),
                 jax.ShapeDtypeStruct((B * Q, K), jnp.float32))

    if not batch_grid:
        # Grid-less single call: whole (tiny) arrays live in VMEM, no per-step
        # pipeline overhead, single HBM writeback per output.
        vmem = pltpu.MemorySpace.VMEM
        y2d, atten2d = pl.pallas_call(
            attention_kernel,
            out_shape=out_shape,
            in_specs=[pl.BlockSpec(memory_space=vmem)] * 7,
            out_specs=(pl.BlockSpec(memory_space=vmem),
                       pl.BlockSpec(memory_space=vmem)),
            cost_estimate=cost,
        )(*args)
    else:
        # Batch-parallel grid: one batch element per step, sharded across
        # TensorCores where available (v7x); bounds VMEM as shapes grow.
        grid_spec = pltpu.PrefetchScalarGridSpec(
            num_scalar_prefetch=0,
            grid=(B,),
            in_specs=[
                pl.BlockSpec((1, Q, D), lambda b: (b, 0, 0)),
                pl.BlockSpec((1, K, twoE), lambda b: (b, 0, 0)),
                pl.BlockSpec((twoE, D), lambda b: (0, 0)),
                pl.BlockSpec((1, D), lambda b: (0, 0)),
                pl.BlockSpec((twoE, D), lambda b: (0, 0)),
                pl.BlockSpec((D, D), lambda b: (0, 0)),
                pl.BlockSpec((1, D), lambda b: (0, 0)),
            ],
            out_specs=(pl.BlockSpec((Q, D), lambda b: (b, 0)),
                       pl.BlockSpec((Q, K), lambda b: (b, 0))),
        )
        y2d, atten2d = pl.pallas_call(
            attention_kernel,
            out_shape=out_shape,
            grid_spec=grid_spec,
            compiler_params=pltpu.CompilerParams(
                dimension_semantics=("parallel",)),
            cost_estimate=cost,
        )(*args)

    return y2d.reshape(B, Q, D), atten2d.reshape(B, Q, K)


def _reference(output, context, w_in, b_in, w_out, b_out):
    context_in = context @ w_in.T + b_in
    atten = jnp.einsum('bqd,bkd->bqk', output, context_in)
    atten = jax.nn.softmax(atten, axis=2)
    ctx2 = jnp.einsum('bqk,bke->bqe', atten, context)
    cat = jnp.concatenate([ctx2, output], axis=-1)
    y = jnp.tanh(cat @ w_out.T + b_out)
    return y, atten


if __name__ == "__main__":
    # Small shapes consistent with the module.
    enc_hidden, dec_hidden = 16, 32
    B, enc_seq, dec_seq = 2, 8, 8
    twoE = 2 * enc_hidden

    key = jax.random.PRNGKey(0)
    k1, k2, k3, k4, k5, k6, k7 = jax.random.split(key, 7)

    output = jax.random.normal(k1, (B, dec_seq, dec_hidden), jnp.float32)
    context = jax.random.normal(k2, (B, enc_seq, twoE), jnp.float32)
    mask = jax.random.bernoulli(k3, 0.2, (B, dec_seq, enc_seq))  # unused (see NOTE)

    # torch Linear layout: (out_features, in_features)
    w_in = jax.random.normal(k4, (dec_hidden, twoE), jnp.float32) * 0.1
    b_in = jax.random.normal(k5, (dec_hidden,), jnp.float32) * 0.1
    w_out = jax.random.normal(k6, (dec_hidden, twoE + dec_hidden), jnp.float32) * 0.1
    b_out = jax.random.normal(k7, (dec_hidden,), jnp.float32) * 0.1

    # One-time weight preprocessing (hoisted out of the per-call path).
    params = prepare_attention_params(w_in, b_in, w_out, b_out)

    # Default path (grid-less single call at these tiny shapes).
    y, atten = attention_forward(output, context, mask, params)
    jax.block_until_ready((y, atten))

    # Also exercise the batch-parallel grid path (used at larger shapes / v7x).
    y_g, atten_g = attention_forward(output, context, mask, params, batch_grid=True)
    jax.block_until_ready((y_g, atten_g))

    y_ref, atten_ref = _reference(output, context, w_in, b_in, w_out, b_out)
    assert jnp.allclose(y, y_ref, atol=1e-5), "output mismatch (grid-less path)"
    assert jnp.allclose(atten, atten_ref, atol=1e-5), "atten mismatch (grid-less path)"
    assert jnp.allclose(y_g, y_ref, atol=1e-5), "output mismatch (grid path)"
    assert jnp.allclose(atten_g, atten_ref, atol=1e-5), "atten mismatch (grid path)"

    print("KERNEL_OK")
</pallas_src>

<mosaic_0001>
module attributes {stable_mosaic.version = 11 : i64} {
  func.func @attention_kernel(%arg0: memref<2x8x32xf32, #tpu.memory_space<vmem>>, %arg1: memref<2x8x32xf32, #tpu.memory_space<vmem>>, %arg2: memref<32x32xf32, #tpu.memory_space<vmem>>, %arg3: memref<1x32xf32, #tpu.memory_space<vmem>>, %arg4: memref<32x32xf32, #tpu.memory_space<vmem>>, %arg5: memref<32x32xf32, #tpu.memory_space<vmem>>, %arg6: memref<1x32xf32, #tpu.memory_space<vmem>>, %arg7: memref<16x32xf32, #tpu.memory_space<vmem>>, %arg8: memref<16x8xf32, #tpu.memory_space<vmem>>) attributes {dimension_semantics = [], scalar_prefetch = 0 : i64, scratch_operands = 0 : i64, tpu.core_type = #tpu.core_type<tc>} {
    %c0 = arith.constant 0 : index
    %c0_0 = arith.constant 0 : index
    %c0_1 = arith.constant 0 : index
    %0 = vector.load %arg0[%c0, %c0_0, %c0_1] : memref<2x8x32xf32, #tpu.memory_space<vmem>>, vector<2x8x32xf32>
    %c0_2 = arith.constant 0 : index
    %c0_3 = arith.constant 0 : index
    %c0_4 = arith.constant 0 : index
    %1 = vector.load %arg1[%c0_2, %c0_3, %c0_4] : memref<2x8x32xf32, #tpu.memory_space<vmem>>, vector<2x8x32xf32>
    %2 = vector.shape_cast %1 : vector<2x8x32xf32> to vector<16x32xf32>
    %c0_5 = arith.constant 0 : index
    %c0_6 = arith.constant 0 : index
    %3 = vector.load %arg2[%c0_5, %c0_6] : memref<32x32xf32, #tpu.memory_space<vmem>>, vector<32x32xf32>
    %cst = arith.constant dense<0.000000e+00> : vector<16x32xf32>
    %4 = tpu.matmul %2, %3, %cst {dimension_numbers = #tpu.dot_dimension_numbers<[1], [0], [0], [1], [0, 0, 1, 1], [], []>} : vector<16x32xf32>, vector<32x32xf32>, vector<16x32xf32> -> vector<16x32xf32>
    %c0_7 = arith.constant 0 : index
    %c0_8 = arith.constant 0 : index
    %5 = vector.load %arg3[%c0_7, %c0_8] : memref<1x32xf32, #tpu.memory_space<vmem>>, vector<1x32xf32>
    %6 = vector.broadcast %5 : vector<1x32xf32> to vector<16x32xf32>
    %7 = arith.addf %4, %6 : vector<16x32xf32>
    %8 = vector.shape_cast %7 : vector<16x32xf32> to vector<2x8x32xf32>
    "tpu.trace_start"() <{level = 10 : i32, message = "bqd,bkd->bqk"}> : () -> ()
    %cst_9 = arith.constant dense<0.000000e+00> : vector<2x8x8xf32>
    %9 = tpu.matmul %0, %8, %cst_9 {dimension_numbers = #tpu.dot_dimension_numbers<[2], [2], [1], [1], [0, 0, 0, 1, 1, 1], [0], [0]>} : vector<2x8x32xf32>, vector<2x8x32xf32>, vector<2x8x8xf32> -> vector<2x8x8xf32>
    "tpu.trace_stop"() : () -> ()
    %cst_10 = arith.constant dense<0xFF800000> : vector<2x8xf32>
    %10 = vector.multi_reduction <maximumf>, %9, %cst_10 [2] : vector<2x8x8xf32> to vector<2x8xf32>
    %11 = vector.shape_cast %10 : vector<2x8xf32> to vector<2x8x1xf32>
    %12 = vector.broadcast %11 : vector<2x8x1xf32> to vector<2x8x8xf32>
    %13 = arith.subf %9, %12 : vector<2x8x8xf32>
    %14 = math.exp %13 : vector<2x8x8xf32>
    %cst_11 = arith.constant dense<0.000000e+00> : vector<2x8xf32>
    %15 = vector.multi_reduction <add>, %14, %cst_11 [2] : vector<2x8x8xf32> to vector<2x8xf32>
    %16 = vector.shape_cast %15 : vector<2x8xf32> to vector<2x8x1xf32>
    %17 = tpu.reciprocal %16 : vector<2x8x1xf32> -> vector<2x8x1xf32>
    %18 = vector.broadcast %17 : vector<2x8x1xf32> to vector<2x8x8xf32>
    %19 = arith.mulf %14, %18 : vector<2x8x8xf32>
    %20 = vector.shape_cast %19 : vector<2x8x8xf32> to vector<16x8xf32>
    %c0_12 = arith.constant 0 : index
    %c0_13 = arith.constant 0 : index
    %21 = vector.load %arg8[%c0_12, %c0_13] : memref<16x8xf32, #tpu.memory_space<vmem>>, vector<16x8xf32>
    tpu.vector_store %arg8[%c0_12, %c0_13], %20 {strides = array<i32>} : memref<16x8xf32, #tpu.memory_space<vmem>>, vector<16x8xf32>,
    "tpu.trace_start"() <{level = 10 : i32, message = "bqk,bke->bqe"}> : () -> ()
    %cst_14 = arith.constant dense<0.000000e+00> : vector<2x8x32xf32>
    %22 = tpu.matmul %19, %1, %cst_14 {dimension_numbers = #tpu.dot_dimension_numbers<[2], [1], [1], [2], [0, 0, 0, 1, 1, 2], [0], [0]>} : vector<2x8x8xf32>, vector<2x8x32xf32>, vector<2x8x32xf32> -> vector<2x8x32xf32>
    "tpu.trace_stop"() : () -> ()
    %23 = vector.shape_cast %22 : vector<2x8x32xf32> to vector<16x32xf32>
    %c0_15 = arith.constant 0 : index
    %c0_16 = arith.constant 0 : index
    %24 = vector.load %arg4[%c0_15, %c0_16] : memref<32x32xf32, #tpu.memory_space<vmem>>, vector<32x32xf32>
    %cst_17 = arith.constant dense<0.000000e+00> : vector<16x32xf32>
    %25 = tpu.matmul %23, %24, %cst_17 {dimension_numbers = #tpu.dot_dimension_numbers<[1], [0], [0], [1], [0, 0, 1, 1], [], []>} : vector<16x32xf32>, vector<32x32xf32>, vector<16x32xf32> -> vector<16x32xf32>
    %26 = vector.shape_cast %0 : vector<2x8x32xf32> to vector<16x32xf32>
    %c0_18 = arith.constant 0 : index
    %c0_19 = arith.constant 0 : index
    %27 = vector.load %arg5[%c0_18, %c0_19] : memref<32x32xf32, #tpu.memory_space<vmem>>, vector<32x32xf32>
    %cst_20 = arith.constant dense<0.000000e+00> : vector<16x32xf32>
    %28 = tpu.matmul %26, %27, %cst_20 {dimension_numbers = #tpu.dot_dimension_numbers<[1], [0], [0], [1], [0, 0, 1, 1], [], []>} : vector<16x32xf32>, vector<32x32xf32>, vector<16x32xf32> -> vector<16x32xf32>
    %29 = arith.addf %25, %28 : vector<16x32xf32>
    %c0_21 = arith.constant 0 : index
    %c0_22 = arith.constant 0 : index
    %30 = vector.load %arg6[%c0_21, %c0_22] : memref<1x32xf32, #tpu.memory_space<vmem>>, vector<1x32xf32>
    %31 = vector.broadcast %30 : vector<1x32xf32> to vector<16x32xf32>
    %32 = arith.addf %29, %31 : vector<16x32xf32>
    %33 = math.tanh %32 : vector<16x32xf32>
    %c0_23 = arith.constant 0 : index
    %c0_24 = arith.constant 0 : index
    %34 = vector.load %arg7[%c0_23, %c0_24] : memref<16x32xf32, #tpu.memory_space<vmem>>, vector<16x32xf32>
    tpu.vector_store %arg7[%c0_23, %c0_24], %33 {strides = array<i32>} : memref<16x32xf32, #tpu.memory_space<vmem>>, vector<16x32xf32>,
    return
  }
}

</mosaic_0001>

<llo_original>
// kernel: tpu_custom_call.1
$region0: #{tpu_custom_call.1}
  #allocation0 [shape = 'u32[]', space=smem, size = 0x4, offset = 0x4, fixed_abs, tag = 'smem constant byte address 0x4 - core index']
  #allocation1 [shape = 'u32[144,128]{1,0:T(1,128)}', space=vmem, size = 0x12000, scoped, tag = 'internal scratch']
  %s0 = inlined_call_operand.hbm [shape: f32[2,8,32], index: 0, kind: input, shape index: {}]
  %s1 = inlined_call_operand.hbm [shape: f32[2,8,32], index: 1, kind: input, shape index: {}]
  %s2 = inlined_call_operand.hbm [shape: f32[32,32], index: 2, kind: input, shape index: {}]
  %s3 = inlined_call_operand.vmem [shape: f32[1,32], index: 3, kind: input, shape index: {}]
  %s4 = inlined_call_operand.hbm [shape: f32[32,32], index: 4, kind: input, shape index: {}]
  %s5 = inlined_call_operand.hbm [shape: f32[32,32], index: 5, kind: input, shape index: {}]
  %s6 = inlined_call_operand.vmem [shape: f32[1,32], index: 6, kind: input, shape index: {}]
  %s7 = inlined_call_operand.hbm [shape: f32[16,32], index: 7, kind: output, shape index: {0}]
  %s8 = inlined_call_operand.vmem [shape: f32[16,8], index: 8, kind: output, shape index: {1}]
  %9 = xla_tuple %s7, %s8
  %s10 = sld [smem:[#allocation0]]
  $region66: #{tpu_custom_call.1} parent=0
    _
  %s12 = ssub.s32 1, %s10
  %s13 = scalar_select 0, %s12, %s10
  $region1: #{tpu_custom_call.1} parent=0
    #allocation2 [shape = 'u8[8192]{0}', space=vmem, size = 0x2000, scoped, tag = 'input window, operand 0, single buffered']
    #allocation3 [shape = 's32[1]{0}', space=sflag, size = 0x4, scoped, tag = 'scoped memory for tpu_custom_call.1']
    #allocation4 [shape = 's32[1]{0}', space=sflag, size = 0x4, scoped, tag = 'scoped memory for tpu_custom_call.1']
    #allocation5 [shape = 'u8[8192]{0}', space=vmem, size = 0x2000, scoped, tag = 'input window, operand 1, single buffered']
    #allocation6 [shape = 's32[1]{0}', space=sflag, size = 0x4, scoped, tag = 'scoped memory for tpu_custom_call.1']
    #allocation7 [shape = 'u8[16384]{0}', space=vmem, size = 0x4000, scoped, tag = 'input window, operand 2, single buffered']
    #allocation8 [shape = 'u8[16384]{0}', space=vmem, size = 0x4000, scoped, tag = 'input window, operand 4, single buffered']
    #allocation9 [shape = 's32[1]{0}', space=sflag, size = 0x4, scoped, tag = 'scoped memory for tpu_custom_call.1']
    #allocation10 [shape = 'u8[16384]{0}', space=vmem, size = 0x4000, scoped, tag = 'input window, operand 5, single buffered']
    #allocation11 [shape = 'u8[8192]{0}', space=vmem, size = 0x2000, scoped, tag = 'output window, operand 0, single buffered']
    %14 = vsyncpa [#allocation3], 0
    %15 = vsyncpa [#allocation6], 0
    %16 = vsyncpa [#allocation9], 0
    %17 = vsyncpa [#allocation4], 0
    // Predicated region
    $region2: #{tpu_custom_call.1} parent=1 // pred_check
      _
    $region3: #{tpu_custom_call.1} parent=1 // pred_check_branch
      %19 = sbr.rel (0) target = $region5
    $region4: #{tpu_custom_call.1} parent=1 // pred_region
      %s21 = ssub.s32 256, 256
      %22 = vsyncadd [#allocation3], %s21
      %s23 = sshll.u32 [#allocation2], 4
      %s24 = int_to_ptr.vmem [resolvable:$true] %s23
      %29 = dma.hbm_to_vmem [thread:$0]  %s0, 256, %s24, [#allocation3], 128, 128, 8
    $region5: #{tpu_custom_call.1} parent=1 // pred_fallthru
      _
    // Predicated region
    $region6: #{tpu_custom_call.1} parent=1 // pred_check
      _
    $region7: #{tpu_custom_call.1} parent=1 // pred_check_branch
      %31 = sbr.rel (0) target = $region9
    $region8: #{tpu_custom_call.1} parent=1 // pred_region
      %s33 = ssub.s32 256, 256
      %34 = vsyncadd [#allocation6], %s33
      %s35 = sshll.u32 [#allocation5], 4
      %s36 = int_to_ptr.vmem [resolvable:$true] %s35
      %41 = dma.hbm_to_vmem [thread:$0]  %s1, 256, %s36, [#allocation6], 128, 128, 8
    $region9: #{tpu_custom_call.1} parent=1 // pred_fallthru
      _
    // Predicated region
    $region10: #{tpu_custom_call.1} parent=1 // pred_check
      _
    $region11: #{tpu_custom_call.1} parent=1 // pred_check_branch
      %43 = sbr.rel (0) target = $region13
    $region12: #{tpu_custom_call.1} parent=1 // pred_region
      %s45 = ssub.s32 512, 512
      %46 = vsyncadd [#allocation6], %s45
      %s47 = sshll.u32 [#allocation7], 4
      %s48 = int_to_ptr.vmem [resolvable:$true] %s47
      %53 = dma.hbm_to_vmem [thread:$0]  %s2, 512, %s48, [#allocation6], 128, 128, 8
    $region13: #{tpu_custom_call.1} parent=1 // pred_fallthru
      _
    // Predicated region
    $region14: #{tpu_custom_call.1} parent=1 // pred_check
      _
    $region15: #{tpu_custom_call.1} parent=1 // pred_check_branch
      %55 = sbr.rel (0) target = $region17
    $region16: #{tpu_custom_call.1} parent=1 // pred_region
      _
    $region17: #{tpu_custom_call.1} parent=1 // pred_fallthru
      _
    // Predicated region
    $region18: #{tpu_custom_call.1} parent=1 // pred_check
      _
    $region19: #{tpu_custom_call.1} parent=1 // pred_check_branch
      %57 = sbr.rel (0) target = $region21
    $region20: #{tpu_custom_call.1} parent=1 // pred_region
      %s59 = ssub.s32 512, 512
      %60 = vsyncadd [#allocation9], %s59
      %s61 = sshll.u32 [#allocation8], 4
      %s62 = int_to_ptr.vmem [resolvable:$true] %s61
      %67 = dma.hbm_to_vmem [thread:$0]  %s4, 512, %s62, [#allocation9], 128, 128, 8
    $region21: #{tpu_custom_call.1} parent=1 // pred_fallthru
      _
    // Predicated region
    $region22: #{tpu_custom_call.1} parent=1 // pred_check
      _
    $region23: #{tpu_custom_call.1} parent=1 // pred_check_branch
      %69 = sbr.rel (0) target = $region25
    $region24: #{tpu_custom_call.1} parent=1 // pred_region
      %s71 = ssub.s32 512, 512
      %72 = vsyncadd [#allocation9], %s71
      %s73 = sshll.u32 [#allocation10], 4
      %s74 = int_to_ptr.vmem [resolvable:$true] %s73
      %79 = dma.hbm_to_vmem [thread:$0]  %s5, 512, %s74, [#allocation9], 128, 128, 8
    $region25: #{tpu_custom_call.1} parent=1 // pred_fallthru
      _
    // Predicated region
    $region26: #{tpu_custom_call.1} parent=1 // pred_check
      _
    $region27: #{tpu_custom_call.1} parent=1 // pred_check_branch
      %81 = sbr.rel (0) target = $region29
    $region28: #{tpu_custom_call.1} parent=1 // pred_region
      _
    $region29: #{tpu_custom_call.1} parent=1 // pred_fallthru
      _
    // Predicated region
    $region30: #{tpu_custom_call.1} parent=1 // pred_check
      _
    $region31: #{tpu_custom_call.1} parent=1 // pred_check_branch
      %83 = sbr.rel (0) target = $region33
    $region32: #{tpu_custom_call.1} parent=1 // pred_region
      %84 = dma.done [#allocation3], 256
    $region33: #{tpu_custom_call.1} parent=1 // pred_fallthru
      _
    // Predicated region
    $region34: #{tpu_custom_call.1} parent=1 // pred_check
      _
    $region35: #{tpu_custom_call.1} parent=1 // pred_check_branch
      %86 = sbr.rel (0) target = $region37
    $region36: #{tpu_custom_call.1} parent=1 // pred_region
      %87 = dma.done [#allocation6], 256
    $region37: #{tpu_custom_call.1} parent=1 // pred_fallthru
      _
    // Predicated region
    $region38: #{tpu_custom_call.1} parent=1 // pred_check
      _
    $region39: #{tpu_custom_call.1} parent=1 // pred_check_branch
      %89 = sbr.rel (0) target = $region41
    $region40: #{tpu_custom_call.1} parent=1 // pred_region
      %90 = dma.done [#allocation6], 512
    $region41: #{tpu_custom_call.1} parent=1 // pred_fallthru
      _
    // Predicated region
    $region42: #{tpu_custom_call.1} parent=1 // pred_check
      _
    $region43: #{tpu_custom_call.1} parent=1 // pred_check_branch
      %92 = sbr.rel (0) target = $region45
    $region44: #{tpu_custom_call.1} parent=1 // pred_region
      %93 = dma.done [#allocation9], 512
    $region45: #{tpu_custom_call.1} parent=1 // pred_fallthru
      _
    // Predicated region
    $region46: #{tpu_custom_call.1} parent=1 // pred_check
      _
    $region47: #{tpu_custom_call.1} parent=1 // pred_check_branch
      %95 = sbr.rel (0) target = $region49
    $region48: #{tpu_custom_call.1} parent=1 // pred_region
      %96 = dma.done [#allocation9], 512
    $region49: #{tpu_custom_call.1} parent=1 // pred_fallthru
      _
    %v97 = vld [vmem:[#allocation2] sm:$0xff]
    %v98 = vld [vmem:[#allocation2 + $0x8] sm:$0xff]
    %v99 = vld [vmem:[#allocation5] sm:$0xff]
    %v100 = vld [vmem:[#allocation5 + $0x8] sm:$0xff]
    %v101 = vld [vmem:[#allocation7] sm:$0xff]
    %v102 = vld [vmem:[#allocation7 + $0x8] sm:$0xff]
    %v103 = vld [vmem:[#allocation7 + $0x10] sm:$0xff]
    %v104 = vld [vmem:[#allocation7 + $0x18] sm:$0xff]
    %v105 = vld [vmem:[%s3] sm:$0x1]
    %v107 = vlaneseq
    %v108 = vshrl.u32 %v107, 7
    %v109 = vsub.s32 0, %v108
    %v110 = vrot.slane %v105, %v109
    %vm112 = vcmask 261120
    %v114 = vsel %vm112, %v99, 0
    %v117 = vsel %vm112, %v100, 0
    %119 = vmatprep.subr.mxu0 0.0
    %120 = vmatpush1.msra.mxu0 0.0
    %121 = vmatprep.subr.mxu0 0.0
    %122 = vmatpush1.msra.mxu0 0.0
    %123 = vmatprep.subr.mxu0 0.0
    %124 = vmatpush1.msra.mxu0 0.0
    %125 = vmatprep.subr.mxu0 0.0
    %126 = vmatpush1.msra.mxu0 0.0
    %127 = vmatprep.subr.mxu0 0.0
    %128 = vmatpush1.msra.mxu0 0.0
    %129 = vmatprep.subr.mxu0 0.0
    %130 = vmatpush1.msra.mxu0 0.0
    %131 = vmatprep.subr.mxu0 0.0
    %132 = vmatpush1.msra.mxu0 0.0
    %133 = vmatprep.subr.mxu0 0.0
    %134 = vmatpush1.msra.mxu0 0.0
    %135 = vmatprep.subr.mxu0 0.0
    %136 = vmatpush1.msra.mxu0 0.0
    %137 = vmatprep.subr.mxu0 0.0
    %138 = vmatpush1.msra.mxu0 0.0
    %139 = vmatprep.subr.mxu0 0.0
    %140 = vmatpush1.msra.mxu0 0.0
    %141 = vmatprep.subr.mxu0 0.0
    %142 = vmatpush1.msra.mxu0 0.0
    %143 = vmatprep.subr.mxu0 0.0
    %144 = vmatpush1.msra.mxu0 %v104
    %145 = vmatprep.subr.mxu0 0.0
    %146 = vmatpush1.msra.mxu0 %v103
    %147 = vmatprep.subr.mxu0 0.0
    %148 = vmatpush1.msra.mxu0 %v102
    %149 = vmatprep.subr.mxu0 0.0
    %150 = vmatpush1.msra.mxu0 %v101
    %151 = vmatprep.subr.mxu0 0.0
    %152 = vmatpush2.msra.mxu0 0.0
    %153 = vmatprep.subr.mxu0 0.0
    %154 = vmatpush2.msra.mxu0 0.0
    %155 = vmatprep.subr.mxu0 0.0
    %156 = vmatpush2.msra.mxu0 0.0
    %157 = vmatprep.subr.mxu0 0.0
    %158 = vmatpush2.msra.mxu0 0.0
    %159 = vmatprep.subr.mxu0 0.0
    %160 = vmatpush2.msra.mxu0 0.0
    %161 = vmatprep.subr.mxu0 0.0
    %162 = vmatpush2.msra.mxu0 0.0
    %163 = vmatprep.subr.mxu0 0.0
    %164 = vmatpush2.msra.mxu0 0.0
    %165 = vmatprep.subr.mxu0 0.0
    %166 = vmatpush2.msra.mxu0 0.0
    %167 = vmatprep.subr.mxu0 0.0
    %168 = vmatpush2.msra.mxu0 0.0
    %169 = vmatprep.subr.mxu0 0.0
    %170 = vmatpush2.msra.mxu0 0.0
    %171 = vmatprep.subr.mxu0 0.0
    %172 = vmatpush2.msra.mxu0 0.0
    %173 = vmatprep.subr.mxu0 0.0
    %174 = vmatpush2.msra.mxu0 0.0
    %175 = vmatprep.subr.mxu0 0.0
    %176 = vmatpush2.msra.mxu0 0.0
    %177 = vmatprep.subr.mxu0 0.0
    %178 = vmatpush2.msra.mxu0 0.0
    %179 = vmatprep.subr.mxu0 0.0
    %180 = vmatpush2.msra.mxu0 0.0
    %181 = vmatprep.subr.mxu0 0.0
    %182 = vmatpush2.msra.mxu0 0.0
    %183 = vmatprep.mubr.f32.mxu0 0.0
    %184 = vmatmul.mubr.f32.gmra.mxu0 %v114
    %v185 = vpop.f32.mrf.mxu0
    %v186 = vadd.f32 %v110, %v185
    %v187 = vpop.f32.mrf.mxu0
    %188 = vmatprep.mubr.f32.mxu0 0.0
    %189 = vmatmul.mubr.f32.gmra.mxu0 %v117
    %v190 = vpop.f32.mrf.mxu0
    %v191 = vadd.f32 %v110, %v190
    %v192 = vpop.f32.mrf.mxu0
    %193 = vdwg.mxu0
    %v195 = vsel %vm112, %v97, 0
    %v198 = vsel %vm112, %v186, 0
    %200 = vmatprep.subr.mxu0 0.0
    %201 = vmatpush1.xpose.msra.mxu0 0.0
    %202 = vmatprep.subr.mxu0 0.0
    %203 = vmatpush1.xpose.msra.mxu0 0.0
    %204 = vmatprep.subr.mxu0 0.0
    %205 = vmatpush1.xpose.msra.mxu0 0.0
    %206 = vmatprep.subr.mxu0 0.0
    %207 = vmatpush1.xpose.msra.mxu0 0.0
    %208 = vmatprep.subr.mxu0 0.0
    %209 = vmatpush1.xpose.msra.mxu0 0.0
    %210 = vmatprep.subr.mxu0 0.0
    %211 = vmatpush1.xpose.msra.mxu0 0.0
    %212 = vmatprep.subr.mxu0 0.0
    %213 = vmatpush1.xpose.msra.mxu0 0.0
    %214 = vmatprep.subr.mxu0 0.0
    %215 = vmatpush1.xpose.msra.mxu0 0.0
    %216 = vmatprep.subr.mxu0 0.0
    %217 = vmatpush1.xpose.msra.mxu0 0.0
    %218 = vmatprep.subr.mxu0 0.0
    %219 = vmatpush1.xpose.msra.mxu0 0.0
    %220 = vmatprep.subr.mxu0 0.0
    %221 = vmatpush1.xpose.msra.mxu0 0.0
    %222 = vmatprep.subr.mxu0 0.0
    %223 = vmatpush1.xpose.msra.mxu0 0.0
    %224 = vmatprep.subr.mxu0 0.0
    %225 = vmatpush1.xpose.msra.mxu0 0.0
    %226 = vmatprep.subr.mxu0 0.0
    %227 = vmatpush1.xpose.msra.mxu0 0.0
    %228 = vmatprep.subr.mxu0 0.0
    %229 = vmatpush1.xpose.msra.mxu0 0.0
    %230 = vmatprep.subr.mxu0 0.0
    %231 = vmatpush1.xpose.msra.mxu0 %v198
    %232 = vmatprep.subr.mxu0 0.0
    %233 = vmatpush2.xpose.msra.mxu0 0.0
    %234 = vmatprep.subr.mxu0 0.0
    %235 = vmatpush2.xpose.msra.mxu0 0.0
    %236 = vmatprep.subr.mxu0 0.0
    %237 = vmatpush2.xpose.msra.mxu0 0.0
    %238 = vmatprep.subr.mxu0 0.0
    %239 = vmatpush2.xpose.msra.mxu0 0.0
    %240 = vmatprep.subr.mxu0 0.0
    %241 = vmatpush2.xpose.msra.mxu0 0.0
    %242 = vmatprep.subr.mxu0 0.0
    %243 = vmatpush2.xpose.msra.mxu0 0.0
    %244 = vmatprep.subr.mxu0 0.0
    %245 = vmatpush2.xpose.msra.mxu0 0.0
    %246 = vmatprep.subr.mxu0 0.0
    %247 = vmatpush2.xpose.msra.mxu0 0.0
    %248 = vmatprep.subr.mxu0 0.0
    %249 = vmatpush2.xpose.msra.mxu0 0.0
    %250 = vmatprep.subr.mxu0 0.0
    %251 = vmatpush2.xpose.msra.mxu0 0.0
    %252 = vmatprep.subr.mxu0 0.0
    %253 = vmatpush2.xpose.msra.mxu0 0.0
    %254 = vmatprep.subr.mxu0 0.0
    %255 = vmatpush2.xpose.msra.mxu0 0.0
    %256 = vmatprep.subr.mxu0 0.0
    %257 = vmatpush2.xpose.msra.mxu0 0.0
    %258 = vmatprep.subr.mxu0 0.0
    %259 = vmatpush2.xpose.msra.mxu0 0.0
    %260 = vmatprep.subr.mxu0 0.0
    %261 = vmatpush2.xpose.msra.mxu0 0.0
    %262 = vmatprep.subr.mxu0 0.0
    %263 = vmatpush2.xpose.msra.mxu0 0.0
    %264 = vmatprep.mubr.f32.mxu0 0.0
    %265 = vmatmul.mubr.f32.gmra.mxu0 %v195
    %v266 = vpop.f32.mrf.mxu0
    %v267 = vadd.f32 0.0, %v266
    %v268 = vpop.f32.mrf.mxu0
    %269 = vdwg.mxu0
    %v271 = vsel %vm112, %v98, 0
    %v274 = vsel %vm112, %v191, 0
    %276 = vmatprep.subr.mxu0 0.0
    %277 = vmatpush1.xpose.msra.mxu0 0.0
    %278 = vmatprep.subr.mxu0 0.0
    %279 = vmatpush1.xpose.msra.mxu0 0.0
    %280 = vmatprep.subr.mxu0 0.0
    %281 = vmatpush1.xpose.msra.mxu0 0.0
    %282 = vmatprep.subr.mxu0 0.0
    %283 = vmatpush1.xpose.msra.mxu0 0.0
    %284 = vmatprep.subr.mxu0 0.0
    %285 = vmatpush1.xpose.msra.mxu0 0.0
    %286 = vmatprep.subr.mxu0 0.0
    %287 = vmatpush1.xpose.msra.mxu0 0.0
    %288 = vmatprep.subr.mxu0 0.0
    %289 = vmatpush1.xpose.msra.mxu0 0.0
    %290 = vmatprep.subr.mxu0 0.0
    %291 = vmatpush1.xpose.msra.mxu0 0.0
    %292 = vmatprep.subr.mxu0 0.0
    %293 = vmatpush1.xpose.msra.mxu0 0.0
    %294 = vmatprep.subr.mxu0 0.0
    %295 = vmatpush1.xpose.msra.mxu0 0.0
    %296 = vmatprep.subr.mxu0 0.0
    %297 = vmatpush1.xpose.msra.mxu0 0.0
    %298 = vmatprep.subr.mxu0 0.0
    %299 = vmatpush1.xpose.msra.mxu0 0.0
    %300 = vmatprep.subr.mxu0 0.0
    %301 = vmatpush1.xpose.msra.mxu0 0.0
    %302 = vmatprep.subr.mxu0 0.0
    %303 = vmatpush1.xpose.msra.mxu0 0.0
    %304 = vmatprep.subr.mxu0 0.0
    %305 = vmatpush1.xpose.msra.mxu0 0.0
    %306 = vmatprep.subr.mxu0 0.0
    %307 = vmatpush1.xpose.msra.mxu0 %v274
    %308 = vmatprep.subr.mxu0 0.0
    %309 = vmatpush2.xpose.msra.mxu0 0.0
    %310 = vmatprep.subr.mxu0 0.0
    %311 = vmatpush2.xpose.msra.mxu0 0.0
    %312 = vmatprep.subr.mxu0 0.0
    %313 = vmatpush2.xpose.msra.mxu0 0.0
    %314 = vmatprep.subr.mxu0 0.0
    %315 = vmatpush2.xpose.msra.mxu0 0.0
    %316 = vmatprep.subr.mxu0 0.0
    %317 = vmatpush2.xpose.msra.mxu0 0.0
    %318 = vmatprep.subr.mxu0 0.0
    %319 = vmatpush2.xpose.msra.mxu0 0.0
    %320 = vmatprep.subr.mxu0 0.0
    %321 = vmatpush2.xpose.msra.mxu0 0.0
    %322 = vmatprep.subr.mxu0 0.0
    %323 = vmatpush2.xpose.msra.mxu0 0.0
    %324 = vmatprep.subr.mxu0 0.0
    %325 = vmatpush2.xpose.msra.mxu0 0.0
    %326 = vmatprep.subr.mxu0 0.0
    %327 = vmatpush2.xpose.msra.mxu0 0.0
    %328 = vmatprep.subr.mxu0 0.0
    %329 = vmatpush2.xpose.msra.mxu0 0.0
    %330 = vmatprep.subr.mxu0 0.0
    %331 = vmatpush2.xpose.msra.mxu0 0.0
    %332 = vmatprep.subr.mxu0 0.0
    %333 = vmatpush2.xpose.msra.mxu0 0.0
    %334 = vmatprep.subr.mxu0 0.0
    %335 = vmatpush2.xpose.msra.mxu0 0.0
    %336 = vmatprep.subr.mxu0 0.0
    %337 = vmatpush2.xpose.msra.mxu0 0.0
    %338 = vmatprep.subr.mxu0 0.0
    %339 = vmatpush2.xpose.msra.mxu0 0.0
    %340 = vmatprep.mubr.f32.mxu0 0.0
    %341 = vmatmul.mubr.f32.gmra.mxu0 %v271
    %v342 = vpop.f32.mrf.mxu0
    %v343 = vadd.f32 0.0, %v342
    %v344 = vpop.f32.mrf.mxu0
    %345 = vdwg.mxu0
    %vm346 = vcmask 64512
    %v347 = vsel %vm346, %v267, -inf
    %348 = vmax.xlane.f32.xlu0 %v347
    %v349 = vpop.xlane.xlu0 %348
    %v350 = vsel %vm346, %v343, -inf
    %351 = vmax.xlane.f32.xlu0 %v350
    %v352 = vpop.xlane.xlu0 %351
    %v353 = vsub.f32 %v267, %v349
    %v354 = vsub.f32 %v343, %v352
    %v355 = vmul.f32 %v353, 1.442695
    %v356 = vpow.pop %v355
    %v357 = vmul.f32 %v354, 1.442695
    %v358 = vpow.pop %v357
    %v359 = vsel %vm346, %v356, 0.0
    %360 = vadd.xlane.f32.xlu0 %v359
    %v361 = vpop.xlane.xlu0 %360
    %v362 = vsel %vm346, %v358, 0.0
    %363 = vadd.xlane.f32.xlu0 %v362
    %v364 = vpop.xlane.xlu0 %363
    %v365 = vrcp.pop %v361
    %v366 = vrcp.pop %v364
    %v367 = vmul.f32 %v356, %v365
    %v368 = vmul.f32 %v358, %v366
    %369 = vst.msk [vmem:[%s8] sm:$0xff] %vm346, %v367
    %370 = vst.msk [vmem:[%s8 + $0x8] sm:$0xff] %vm346, %v368
    %v372 = vsel %vm346, %v367, 0
    %374 = vmatprep.subr.mxu0 0.0
    %375 = vmatpush1.msra.mxu0 0.0
    %376 = vmatprep.subr.mxu0 0.0
    %377 = vmatpush1.msra.mxu0 0.0
    %378 = vmatprep.subr.mxu0 0.0
    %379 = vmatpush1.msra.mxu0 0.0
    %380 = vmatprep.subr.mxu0 0.0
    %381 = vmatpush1.msra.mxu0 0.0
    %382 = vmatprep.subr.mxu0 0.0
    %383 = vmatpush1.msra.mxu0 0.0
    %384 = vmatprep.subr.mxu0 0.0
    %385 = vmatpush1.msra.mxu0 0.0
    %386 = vmatprep.subr.mxu0 0.0
    %387 = vmatpush1.msra.mxu0 0.0
    %388 = vmatprep.subr.mxu0 0.0
    %389 = vmatpush1.msra.mxu0 0.0
    %390 = vmatprep.subr.mxu0 0.0
    %391 = vmatpush1.msra.mxu0 0.0
    %392 = vmatprep.subr.mxu0 0.0
    %393 = vmatpush1.msra.mxu0 0.0
    %394 = vmatprep.subr.mxu0 0.0
    %395 = vmatpush1.msra.mxu0 0.0
    %396 = vmatprep.subr.mxu0 0.0
    %397 = vmatpush1.msra.mxu0 0.0
    %398 = vmatprep.subr.mxu0 0.0
    %399 = vmatpush1.msra.mxu0 0.0
    %400 = vmatprep.subr.mxu0 0.0
    %401 = vmatpush1.msra.mxu0 0.0
    %402 = vmatprep.subr.mxu0 0.0
    %403 = vmatpush1.msra.mxu0 0.0
    %404 = vmatprep.subr.mxu0 0.0
    %405 = vmatpush1.msra.mxu0 %v99
    %406 = vmatprep.subr.mxu0 0.0
    %407 = vmatpush2.msra.mxu0 0.0
    %408 = vmatprep.subr.mxu0 0.0
    %409 = vmatpush2.msra.mxu0 0.0
    %410 = vmatprep.subr.mxu0 0.0
    %411 = vmatpush2.msra.mxu0 0.0
    %412 = vmatprep.subr.mxu0 0.0
    %413 = vmatpush2.msra.mxu0 0.0
    %414 = vmatprep.subr.mxu0 0.0
    %415 = vmatpush2.msra.mxu0 0.0
    %416 = vmatprep.subr.mxu0 0.0
    %417 = vmatpush2.msra.mxu0 0.0
    %418 = vmatprep.subr.mxu0 0.0
    %419 = vmatpush2.msra.mxu0 0.0
    %420 = vmatprep.subr.mxu0 0.0
    %421 = vmatpush2.msra.mxu0 0.0
    %422 = vmatprep.subr.mxu0 0.0
    %423 = vmatpush2.msra.mxu0 0.0
    %424 = vmatprep.subr.mxu0 0.0
    %425 = vmatpush2.msra.mxu0 0.0
    %426 = vmatprep.subr.mxu0 0.0
    %427 = vmatpush2.msra.mxu0 0.0
    %428 = vmatprep.subr.mxu0 0.0
    %429 = vmatpush2.msra.mxu0 0.0
    %430 = vmatprep.subr.mxu0 0.0
    %431 = vmatpush2.msra.mxu0 0.0
    %432 = vmatprep.subr.mxu0 0.0
    %433 = vmatpush2.msra.mxu0 0.0
    %434 = vmatprep.subr.mxu0 0.0
    %435 = vmatpush2.msra.mxu0 0.0
    %436 = vmatprep.subr.mxu0 0.0
    %437 = vmatpush2.msra.mxu0 0.0
    %438 = vmatprep.mubr.f32.mxu0 0.0
    %439 = vmatmul.mubr.f32.gmra.mxu0 %v372
    %v440 = vpop.f32.mrf.mxu0
    %v441 = vadd.f32 0.0, %v440
    %v442 = vpop.f32.mrf.mxu0
    %443 = vdwg.mxu0
    %v445 = vsel %vm346, %v368, 0
    %447 = vmatprep.subr.mxu0 0.0
    %448 = vmatpush1.msra.mxu0 0.0
    %449 = vmatprep.subr.mxu0 0.0
    %450 = vmatpush1.msra.mxu0 0.0
    %451 = vmatprep.subr.mxu0 0.0
    %452 = vmatpush1.msra.mxu0 0.0
    %453 = vmatprep.subr.mxu0 0.0
    %454 = vmatpush1.msra.mxu0 0.0
    %455 = vmatprep.subr.mxu0 0.0
    %456 = vmatpush1.msra.mxu0 0.0
    %457 = vmatprep.subr.mxu0 0.0
    %458 = vmatpush1.msra.mxu0 0.0
    %459 = vmatprep.subr.mxu0 0.0
    %460 = vmatpush1.msra.mxu0 0.0
    %461 = vmatprep.subr.mxu0 0.0
    %462 = vmatpush1.msra.mxu0 0.0
    %463 = vmatprep.subr.mxu0 0.0
    %464 = vmatpush1.msra.mxu0 0.0
    %465 = vmatprep.subr.mxu0 0.0
    %466 = vmatpush1.msra.mxu0 0.0
    %467 = vmatprep.subr.mxu0 0.0
    %468 = vmatpush1.msra.mxu0 0.0
    %469 = vmatprep.subr.mxu0 0.0
    %470 = vmatpush1.msra.mxu0 0.0
    %471 = vmatprep.subr.mxu0 0.0
    %472 = vmatpush1.msra.mxu0 0.0
    %473 = vmatprep.subr.mxu0 0.0
    %474 = vmatpush1.msra.mxu0 0.0
    %475 = vmatprep.subr.mxu0 0.0
    %476 = vmatpush1.msra.mxu0 0.0
    %477 = vmatprep.subr.mxu0 0.0
    %478 = vmatpush1.msra.mxu0 %v100
    %479 = vmatprep.subr.mxu0 0.0
    %480 = vmatpush2.msra.mxu0 0.0
    %481 = vmatprep.subr.mxu0 0.0
    %482 = vmatpush2.msra.mxu0 0.0
    %483 = vmatprep.subr.mxu0 0.0
    %484 = vmatpush2.msra.mxu0 0.0
    %485 = vmatprep.subr.mxu0 0.0
    %486 = vmatpush2.msra.mxu0 0.0
    %487 = vmatprep.subr.mxu0 0.0
    %488 = vmatpush2.msra.mxu0 0.0
    %489 = vmatprep.subr.mxu0 0.0
    %490 = vmatpush2.msra.mxu0 0.0
    %491 = vmatprep.subr.mxu0 0.0
    %492 = vmatpush2.msra.mxu0 0.0
    %493 = vmatprep.subr.mxu0 0.0
    %494 = vmatpush2.msra.mxu0 0.0
    %495 = vmatprep.subr.mxu0 0.0
    %496 = vmatpush2.msra.mxu0 0.0
    %497 = vmatprep.subr.mxu0 0.0
    %498 = vmatpush2.msra.mxu0 0.0
    %499 = vmatprep.subr.mxu0 0.0
    %500 = vmatpush2.msra.mxu0 0.0
    %501 = vmatprep.subr.mxu0 0.0
    %502 = vmatpush2.msra.mxu0 0.0
    %503 = vmatprep.subr.mxu0 0.0
    %504 = vmatpush2.msra.mxu0 0.0
    %505 = vmatprep.subr.mxu0 0.0
    %506 = vmatpush2.msra.mxu0 0.0
    %507 = vmatprep.subr.mxu0 0.0
    %508 = vmatpush2.msra.mxu0 0.0
    %509 = vmatprep.subr.mxu0 0.0
    %510 = vmatpush2.msra.mxu0 0.0
    %511 = vmatprep.mubr.f32.mxu0 0.0
    %512 = vmatmul.mubr.f32.gmra.mxu0 %v445
    %v513 = vpop.f32.mrf.mxu0
    %v514 = vadd.f32 0.0, %v513
    %v515 = vpop.f32.mrf.mxu0
    %516 = vdwg.mxu0
    %v517 = vld [vmem:[#allocation8] sm:$0xff]
    %v518 = vld [vmem:[#allocation8 + $0x8] sm:$0xff]
    %v519 = vld [vmem:[#allocation8 + $0x10] sm:$0xff]
    %v520 = vld [vmem:[#allocation8 + $0x18] sm:$0xff]
    %v521 = vld [vmem:[#allocation10] sm:$0xff]
    %v522 = vld [vmem:[#allocation10 + $0x8] sm:$0xff]
    %v523 = vld [vmem:[#allocation10 + $0x10] sm:$0xff]
    %v524 = vld [vmem:[#allocation10 + $0x18] sm:$0xff]
    %525 = vmatprep.subr.mxu0 0.0
    %526 = vmatpush1.msra.mxu0 0.0
    %527 = vmatprep.subr.mxu0 0.0
    %528 = vmatpush1.msra.mxu0 0.0
    %529 = vmatprep.subr.mxu0 0.0
    %530 = vmatpush1.msra.mxu0 0.0
    %531 = vmatprep.subr.mxu0 0.0
    %532 = vmatpush1.msra.mxu0 0.0
    %533 = vmatprep.subr.mxu0 0.0
    %534 = vmatpush1.msra.mxu0 0.0
    %535 = vmatprep.subr.mxu0 0.0
    %536 = vmatpush1.msra.mxu0 0.0
    %537 = vmatprep.subr.mxu0 0.0
    %538 = vmatpush1.msra.mxu0 0.0
    %539 = vmatprep.subr.mxu0 0.0
    %540 = vmatpush1.msra.mxu0 0.0
    %541 = vmatprep.subr.mxu0 0.0
    %542 = vmatpush1.msra.mxu0 0.0
    %543 = vmatprep.subr.mxu0 0.0
    %544 = vmatpush1.msra.mxu0 0.0
    %545 = vmatprep.subr.mxu0 0.0
    %546 = vmatpush1.msra.mxu0 0.0
    %547 = vmatprep.subr.mxu0 0.0
    %548 = vmatpush1.msra.mxu0 0.0
    %549 = vmatprep.subr.mxu0 0.0
    %550 = vmatpush1.msra.mxu0 %v524
    %551 = vmatprep.subr.mxu0 0.0
    %552 = vmatpush1.msra.mxu0 %v523
    %553 = vmatprep.subr.mxu0 0.0
    %554 = vmatpush1.msra.mxu0 %v522
    %555 = vmatprep.subr.mxu0 0.0
    %556 = vmatpush1.msra.mxu0 %v521
    %557 = vmatprep.subr.mxu0 0.0
    %558 = vmatpush2.msra.mxu0 0.0
    %559 = vmatprep.subr.mxu0 0.0
    %560 = vmatpush2.msra.mxu0 0.0
    %561 = vmatprep.subr.mxu0 0.0
    %562 = vmatpush2.msra.mxu0 0.0
    %563 = vmatprep.subr.mxu0 0.0
    %564 = vmatpush2.msra.mxu0 0.0
    %565 = vmatprep.subr.mxu0 0.0
    %566 = vmatpush2.msra.mxu0 0.0
    %567 = vmatprep.subr.mxu0 0.0
    %568 = vmatpush2.msra.mxu0 0.0
    %569 = vmatprep.subr.mxu0 0.0
    %570 = vmatpush2.msra.mxu0 0.0
    %571 = vmatprep.subr.mxu0 0.0
    %572 = vmatpush2.msra.mxu0 0.0
    %573 = vmatprep.subr.mxu0 0.0
    %574 = vmatpush2.msra.mxu0 0.0
    %575 = vmatprep.subr.mxu0 0.0
    %576 = vmatpush2.msra.mxu0 0.0
    %577 = vmatprep.subr.mxu0 0.0
    %578 = vmatpush2.msra.mxu0 0.0
    %579 = vmatprep.subr.mxu0 0.0
    %580 = vmatpush2.msra.mxu0 0.0
    %581 = vmatprep.subr.mxu0 0.0
    %582 = vmatpush2.msra.mxu0 0.0
    %583 = vmatprep.subr.mxu0 0.0
    %584 = vmatpush2.msra.mxu0 0.0
    %585 = vmatprep.subr.mxu0 0.0
    %586 = vmatpush2.msra.mxu0 0.0
    %587 = vmatprep.subr.mxu0 0.0
    %588 = vmatpush2.msra.mxu0 0.0
    %589 = vmatprep.mubr.f32.mxu0 0.0
    %590 = vmatmul.mubr.f32.gmra.mxu0 %v195
    %v591 = vpop.f32.mrf.mxu0
    %v592 = vadd.f32 0.0, %v591
    %v593 = vpop.f32.mrf.mxu0
    %594 = vmatprep.mubr.f32.mxu0 0.0
    %595 = vmatmul.mubr.f32.gmra.mxu0 %v271
    %v596 = vpop.f32.mrf.mxu0
    %v597 = vadd.f32 0.0, %v596
    %v598 = vpop.f32.mrf.mxu0
    %599 = vdwg.mxu0
    %v601 = vsel %vm112, %v441, 0
    %v604 = vsel %vm112, %v514, 0
    %606 = vmatprep.subr.mxu0 0.0
    %607 = vmatpush1.msra.mxu0 0.0
    %608 = vmatprep.subr.mxu0 0.0
    %609 = vmatpush1.msra.mxu0 0.0
    %610 = vmatprep.subr.mxu0 0.0
    %611 = vmatpush1.msra.mxu0 0.0
    %612 = vmatprep.subr.mxu0 0.0
    %613 = vmatpush1.msra.mxu0 0.0
    %614 = vmatprep.subr.mxu0 0.0
    %615 = vmatpush1.msra.mxu0 0.0
    %616 = vmatprep.subr.mxu0 0.0
    %617 = vmatpush1.msra.mxu0 0.0
    %618 = vmatprep.subr.mxu0 0.0
    %619 = vmatpush1.msra.mxu0 0.0
    %620 = vmatprep.subr.mxu0 0.0
    %621 = vmatpush1.msra.mxu0 0.0
    %622 = vmatprep.subr.mxu0 0.0
    %623 = vmatpush1.msra.mxu0 0.0
    %624 = vmatprep.subr.mxu0 0.0
    %625 = vmatpush1.msra.mxu0 0.0
    %626 = vmatprep.subr.mxu0 0.0
    %627 = vmatpush1.msra.mxu0 0.0
    %628 = vmatprep.subr.mxu0 0.0
    %629 = vmatpush1.msra.mxu0 0.0
    %630 = vmatprep.subr.mxu0 0.0
    %631 = vmatpush1.msra.mxu0 %v520
    %632 = vmatprep.subr.mxu0 0.0
    %633 = vmatpush1.msra.mxu0 %v519
    %634 = vmatprep.subr.mxu0 0.0
    %635 = vmatpush1.msra.mxu0 %v518
    %636 = vmatprep.subr.mxu0 0.0
    %637 = vmatpush1.msra.mxu0 %v517
    %638 = vmatprep.subr.mxu0 0.0
    %639 = vmatpush2.msra.mxu0 0.0
    %640 = vmatprep.subr.mxu0 0.0
    %641 = vmatpush2.msra.mxu0 0.0
    %642 = vmatprep.subr.mxu0 0.0
    %643 = vmatpush2.msra.mxu0 0.0
    %644 = vmatprep.subr.mxu0 0.0
    %645 = vmatpush2.msra.mxu0 0.0
    %646 = vmatprep.subr.mxu0 0.0
    %647 = vmatpush2.msra.mxu0 0.0
    %648 = vmatprep.subr.mxu0 0.0
    %649 = vmatpush2.msra.mxu0 0.0
    %650 = vmatprep.subr.mxu0 0.0
    %651 = vmatpush2.msra.mxu0 0.0
    %652 = vmatprep.subr.mxu0 0.0
    %653 = vmatpush2.msra.mxu0 0.0
    %654 = vmatprep.subr.mxu0 0.0
    %655 = vmatpush2.msra.mxu0 0.0
    %656 = vmatprep.subr.mxu0 0.0
    %657 = vmatpush2.msra.mxu0 0.0
    %658 = vmatprep.subr.mxu0 0.0
    %659 = vmatpush2.msra.mxu0 0.0
    %660 = vmatprep.subr.mxu0 0.0
    %661 = vmatpush2.msra.mxu0 0.0
    %662 = vmatprep.subr.mxu0 0.0
    %663 = vmatpush2.msra.mxu0 0.0
    %664 = vmatprep.subr.mxu0 0.0
    %665 = vmatpush2.msra.mxu0 0.0
    %666 = vmatprep.subr.mxu0 0.0
    %667 = vmatpush2.msra.mxu0 0.0
    %668 = vmatprep.subr.mxu0 0.0
    %669 = vmatpush2.msra.mxu0 0.0
    %670 = vmatprep.mubr.f32.mxu0 0.0
    %671 = vmatmul.mubr.f32.gmra.mxu0 %v601
    %v672 = vpop.f32.mrf.mxu0
    %v673 = vadd.f32 %v592, %v672
    %v674 = vpop.f32.mrf.mxu0
    %675 = vmatprep.mubr.f32.mxu0 0.0
    %676 = vmatmul.mubr.f32.gmra.mxu0 %v604
    %v677 = vpop.f32.mrf.mxu0
    %v678 = vadd.f32 %v597, %v677
    %v679 = vpop.f32.mrf.mxu0
    %680 = vdwg.mxu0
    %v681 = vld [vmem:[%s6] sm:$0x1]
    %v683 = vlaneseq
    %v684 = vshrl.u32 %v683, 7
    %v685 = vsub.s32 0, %v684
    %v686 = vrot.slane %v681, %v685
    %v688 = vadd.f32 %v673, %v686
    %v689 = vadd.f32 %v678, %v686
    %v690 = vtanh.pop %v688
    %v691 = vtanh.pop %v689
    %692 = vst.msk [vmem:[#allocation11] sm:$0xff] %vm112, %v690
    %693 = vst.msk [vmem:[#allocation11 + $0x8] sm:$0xff] %vm112, %v691
    // Predicated region
    $region50: #{tpu_custom_call.1} parent=1 // pred_check
      _
    $region51: #{tpu_custom_call.1} parent=1 // pred_check_branch
      %695 = sbr.rel (0) target = $region53
    $region52: #{tpu_custom_call.1} parent=1 // pred_region
      %s697 = ssub.s32 256, 256
      %698 = vsyncadd [#allocation4], %s697
      %s699 = sshll.u32 [#allocation11], 4
      %s700 = int_to_ptr.vmem [resolvable:$true] %s699
      %705 = dma.vmem_to_hbm [thread:$0]  %s700, 256, %s7, [#allocation4], 128, 128, 8
    $region53: #{tpu_custom_call.1} parent=1 // pred_fallthru
      _
    // Predicated region
    $region54: #{tpu_custom_call.1} parent=1 // pred_check
      _
    $region55: #{tpu_custom_call.1} parent=1 // pred_check_branch
      %707 = sbr.rel (0) target = $region57
    $region56: #{tpu_custom_call.1} parent=1 // pred_region
      _
    $region57: #{tpu_custom_call.1} parent=1 // pred_fallthru
      _
    // Predicated region
    $region58: #{tpu_custom_call.1} parent=1 // pred_check
      _
    $region59: #{tpu_custom_call.1} parent=1 // pred_check_branch
      %709 = sbr.rel (0) target = $region61
    $region60: #{tpu_custom_call.1} parent=1 // pred_region
      %710 = dma.done [#allocation4], 256
    $region61: #{tpu_custom_call.1} parent=1 // pred_fallthru
      _
    // Predicated region
    $region62: #{tpu_custom_call.1} parent=1 // pred_check
      _
    $region63: #{tpu_custom_call.1} parent=1 // pred_check_branch
      %712 = sbr.rel (0) target = $region65
    $region64: #{tpu_custom_call.1} parent=1 // pred_region
      _
    $region65: #{tpu_custom_call.1} parent=1 // pred_fallthru
      _
    %713 = vsyncpa [#allocation3], 1
    %714 = vsyncpa [#allocation6], 1
    %715 = vsyncpa [#allocation9], 1
    %716 = vsyncpa [#allocation4], 1

</llo_original>
